<compile_context>
chip_gen: v7x
topology: tpu7x:2x2x1
jax: 0.10.0
libtpu: 0.0.40
codegen_flags: <defaults>
</compile_context>

<pallas_src>
import math
from functools import partial

import numpy as np
import jax
import jax.numpy as jnp
from jax.experimental import pallas as pl
from jax.experimental.pallas import tpu as pltpu


# ----------------------------------------------------------------------------
# Generation-aware budgets
# ----------------------------------------------------------------------------
def _hw_budgets():
    """(tile_budget_bytes, vmem_limit_bytes) chosen per TPU generation.
    A T-byte streamed tile costs ~4T of VMEM (double-buffered in + out)."""
    try:
        info = pltpu.get_tpu_info()
        vmem_cap = int(getattr(info, "vmem_capacity_bytes", 0) or 0)
    except Exception:  # not on TPU / query unsupported
        vmem_cap = 0
    if vmem_cap == 0:
        vmem_cap = 128 << 20
    if vmem_cap >= (100 << 20):      # v5e / v6e: 128 MiB VMEM
        return 6 << 20, 64 << 20
    else:                            # v7x: 64 MiB VMEM
        return 4 << 20, 44 << 20


_TILE_BUDGET_BYTES, _VMEM_LIMIT_BYTES = _hw_budgets()


def _silu(x):
    return x * jax.nn.sigmoid(x)


def _pick_tile(n, align, target):
    """Return (tile, num_blocks).  Prefer the largest aligned divisor of n that
    is <= target; otherwise a target-sized aligned tile with a ragged (masked)
    last block.  Never returns a tile larger than max(target, align)."""
    n = int(n)
    align = int(align)
    target = int(max(target, align))
    if n <= align:
        return n, 1                       # full-extent block (always legal)
    upper = min(target, n)
    t = (upper // align) * align
    tt = t
    while tt >= align:
        if n % tt == 0:
            return tt, n // tt
        tt -= align
    t = max(align, t)
    return t, -(-n // t)                  # ragged last block; OOB writes dropped


def _maybe_split_for_megacore(n, align, tile, blocks, batch_blocks):
    """Ensure >= 2 parallel grid points (v7x has 2 TensorCores)."""
    if batch_blocks * blocks >= 2 or tile <= align or n <= align:
        return tile, blocks
    t = max(align, ((tile // 2) // align) * align)
    if t >= tile:
        return tile, blocks
    return t, -(-n // t)


# ----------------------------------------------------------------------------
# Kernel 1 (small, single shot): cond-drop + stem MLP + all FiLM scale/shift MLPs
# ----------------------------------------------------------------------------
def _make_mlp_kernel(n_heads, head_dims, offsets):
    def kernel(*refs):
        mask_ref, null_ref, x_ref, sw_ref, sb_ref, w1c_ref, b1c_ref = refs[:7]
        w2_refs = refs[7:7 + 2 * n_heads]
        out_refs = refs[7 + 2 * n_heads:]

        # cond-drop: keep text embed where mask, else null embed
        x = jnp.where(mask_ref[...] > 0.5, x_ref[...], null_ref[...])
        # stem MLP (weights pre-transposed: contract on axis 0, no in-kernel .T)
        cond = _silu(
            jnp.dot(x, sw_ref[...], preferred_element_type=jnp.float32)
            + sb_ref[...])

        # all per-head first layers collapsed into ONE matmul
        h_all = _silu(
            jnp.dot(cond, w1c_ref[...], preferred_element_type=jnp.float32)
            + b1c_ref[...])

        for i in range(n_heads):
            hd, off = head_dims[i], offsets[i]
            h = h_all[:, off:off + 2 * hd]
            w2, b2 = w2_refs[2 * i], w2_refs[2 * i + 1]
            ss = jnp.dot(h, w2[...], preferred_element_type=jnp.float32) + b2[...]
            out_refs[2 * i][...] = ss[:, :hd] + 1.0    # scale + 1 (hoisted here)
            out_refs[2 * i + 1][...] = ss[:, hd:]      # shift
    return kernel


def film_mlp_pack(keep_mask, text_embeds, params):
    """Returns [(scale_plus_one, shift), ...] per FiLM head, each (B, hidden_dim) f32."""
    B = text_embeds.shape[0]
    films = params["films"]
    head_dims = tuple(fp["w1"].shape[1] // 2 for fp in films)
    n = len(head_dims)
    offsets = tuple(int(v) for v in
                    np.cumsum((0,) + tuple(2 * h for h in head_dims))[:-1])

    w1_cat = jnp.concatenate([fp["w1"] for fp in films], axis=1)
    b1_cat = jnp.concatenate([fp["b1"] for fp in films], axis=0).reshape(1, -1)

    inputs = [keep_mask,
              params["null_text_embed"].reshape(1, -1),
              text_embeds,
              params["stem_w"],
              params["stem_b"].reshape(1, -1),
              w1_cat, b1_cat]
    for fp in films:
        inputs += [fp["w2"], fp["b2"].reshape(1, -1)]

    out_shape = []
    for hd in head_dims:
        out_shape += [jax.ShapeDtypeStruct((B, hd), jnp.float32)] * 2

    outs = pl.pallas_call(
        _make_mlp_kernel(n, head_dims, offsets),
        out_shape=tuple(out_shape),
    )(*inputs)
    return [(outs[2 * i], outs[2 * i + 1]) for i in range(n)]


# ----------------------------------------------------------------------------
# Kernel 2 (hot path): pure FiLM modulation, streams only the hiddens
# ----------------------------------------------------------------------------
def _mod_kernel_packed(cond_ref, hid_ref, o_ref):
    """cond block (1, 2, KD) f32: row 0 = scale+1, row 1 = shift.  hid (1, TM, KD)."""
    sc = cond_ref[:, 0:1, :]
    sh = cond_ref[:, 1:2, :]
    o_ref[...] = (hid_ref[...] * sc + sh).astype(o_ref.dtype)


def _mod_kernel_chanfirst(cond_ref, hid_ref, o_ref, *, d):
    """cond block (1, 2*D, 1) f32: rows [0:D) = scale+1, [D:2D) = shift.  hid (1, D, TN)."""
    sc = cond_ref[:, 0:d, :]
    sh = cond_ref[:, d:2 * d, :]
    o_ref[...] = (hid_ref[...] * sc + sh).astype(o_ref.dtype)


def film_modulate_channel_last(cond_packed, D, k_max, hiddens, *, repeat=1):
    """hiddens: (B*repeat, *spatial, D); cond_packed: (B, 2, k_max*D) f32."""
    Bh = hiddens.shape[0]
    spatial = hiddens.shape[1:-1]
    assert hiddens.shape[-1] == D
    N = int(np.prod(spatial)) if spatial else 1
    dt = hiddens.dtype
    itemsize = jnp.dtype(dt).itemsize
    h = hiddens.reshape(Bh, N, D)

    # lane-dense repack: k rows -> k*D lanes (k*D = lcm(D,128), multiple of 128)
    k = k_max if N >= k_max else 1     # too few rows to repack; accept masked lanes
    cond = cond_packed if k == k_max else cond_packed[:, :, :k * D]
    pad = (-N) % k
    if pad:
        h = jnp.pad(h, ((0, 0), (0, pad), (0, 0)))
    M = (N + pad) // k
    KD = k * D
    h = h.reshape(Bh, M, KD)

    tm_target = max(8, _TILE_BUDGET_BYTES // max(1, KD * itemsize))
    TM, nblk = _pick_tile(M, 8, tm_target)
    TM, nblk = _maybe_split_for_megacore(M, 8, TM, nblk, Bh)

    out = pl.pallas_call(
        _mod_kernel_packed,
        out_shape=jax.ShapeDtypeStruct((Bh, M, KD), dt),
        grid=(Bh, nblk),
        in_specs=[
            pl.BlockSpec((1, 2, KD), lambda b, m: (b // repeat, 0, 0)),
            pl.BlockSpec((1, TM, KD), lambda b, m: (b, m, 0)),
        ],
        out_specs=pl.BlockSpec((1, TM, KD), lambda b, m: (b, m, 0)),
        compiler_params=pltpu.CompilerParams(
            dimension_semantics=("parallel", "parallel"),
            vmem_limit_bytes=_VMEM_LIMIT_BYTES),
    )(cond, h)

    out = out.reshape(Bh, M * k, D)
    if pad:
        out = out[:, :N, :]
    return out.reshape(Bh, *spatial, D) if spatial else out.reshape(Bh, D)


def film_modulate_channel_first(cond_cf, D, hiddens, *, repeat=1):
    """hiddens: (B*repeat, D, *spatial); cond_cf: (B, 2*D, 1) f32 ([scale+1; shift])."""
    Bh = hiddens.shape[0]
    assert hiddens.shape[1] == D
    spatial = hiddens.shape[2:]
    N = int(np.prod(spatial)) if spatial else 1
    dt = hiddens.dtype
    itemsize = jnp.dtype(dt).itemsize
    h = hiddens.reshape(Bh, D, N)

    flat_bytes = D * N * itemsize
    if N < 128 and flat_bytes <= 2 * _TILE_BUDGET_BYTES:
        # Lane-dense fallback for tiny / misaligned spatial extents: flatten the
        # (D, N) plane onto the lane axis; per-channel scale repeated per position.
        sc2 = cond_cf[:, :D, 0]
        sh2 = cond_cf[:, D:, 0]
        cond_flat = jnp.stack([jnp.repeat(sc2, N, axis=-1),
                               jnp.repeat(sh2, N, axis=-1)], axis=1)   # (B, 2, D*N)
        hf = h.reshape(Bh, 1, D * N)
        out = pl.pallas_call(
            _mod_kernel_packed,
            out_shape=jax.ShapeDtypeStruct((Bh, 1, D * N), dt),
            grid=(Bh,),
            in_specs=[
                pl.BlockSpec((1, 2, D * N), lambda b: (b // repeat, 0, 0)),
                pl.BlockSpec((1, 1, D * N), lambda b: (b, 0, 0)),
            ],
            out_specs=pl.BlockSpec((1, 1, D * N), lambda b: (b, 0, 0)),
            compiler_params=pltpu.CompilerParams(
                dimension_semantics=("parallel",),
                vmem_limit_bytes=_VMEM_LIMIT_BYTES),
        )(cond_flat, hf)
        return out.reshape(Bh, D, *spatial) if spatial else out.reshape(Bh, D)

    # native (B, D, N) path (no transposes): scale broadcasts over the lane axis
    tn_target = max(128, _TILE_BUDGET_BYTES // max(1, D * itemsize))
    TN, nblk = _pick_tile(N, 128, tn_target)
    TN, nblk = _maybe_split_for_megacore(N, 128, TN, nblk, Bh)

    out = pl.pallas_call(
        partial(_mod_kernel_chanfirst, d=D),
        out_shape=jax.ShapeDtypeStruct((Bh, D, N), dt),
        grid=(Bh, nblk),
        in_specs=[
            pl.BlockSpec((1, 2 * D, 1), lambda b, n: (b // repeat, 0, 0)),
            pl.BlockSpec((1, D, TN), lambda b, n: (b, 0, n)),
        ],
        out_specs=pl.BlockSpec((1, D, TN), lambda b, n: (b, 0, n)),
        compiler_params=pltpu.CompilerParams(
            dimension_semantics=("parallel", "parallel"),
            vmem_limit_bytes=_VMEM_LIMIT_BYTES),
    )(cond_cf, h)
    return out.reshape(Bh, D, *spatial) if spatial else out.reshape(Bh, D)


# ----------------------------------------------------------------------------
# TextConditioner parameters + forward
# ----------------------------------------------------------------------------
def init_text_conditioner_params(key, total_latent_dim, stem_dim, hidden_dims):
    """Weights stored pre-transposed (contract on axis 0): stem_w (Din, Dout),
    w1 (stem_dim, 2*hd), w2 (2*hd, 2*hd)."""
    ks = jax.random.split(key, 3 + 4 * len(hidden_dims))
    params = {
        "null_text_embed": jax.random.normal(ks[0], (total_latent_dim,), jnp.float32),
        "stem_w": 0.05 * jax.random.normal(ks[1], (total_latent_dim, stem_dim), jnp.float32),
        "stem_b": 0.05 * jax.random.normal(ks[2], (stem_dim,), jnp.float32),
        "films": [],
    }
    for i, hd in enumerate(hidden_dims):
        k1, k2, k3, k4 = ks[3 + 4 * i: 7 + 4 * i]
        # NOTE: the PyTorch module zero-inits the LAST FiLM linear (identity
        # modulation at init).  We use small deterministic random values instead
        # so the kernel compute path is actually exercised in this synthetic test.
        params["films"].append({
            "w1": 0.05 * jax.random.normal(k1, (stem_dim, 2 * hd), jnp.float32),
            "b1": 0.05 * jax.random.normal(k2, (2 * hd,), jnp.float32),
            "w2": 0.05 * jax.random.normal(k3, (2 * hd, 2 * hd), jnp.float32),
            "b2": 0.05 * jax.random.normal(k4, (2 * hd,), jnp.float32),
        })
    return params


def text_conditioner_forward(params, text_embeds, *, cond_drop_prob, drop_key,
                             hiddens_channel_first, repeat_batch=1):
    """Returns a tuple of cond_fns, one per FiLM conditioner (like the nn.Module)."""
    # TODO(synk): T5/CLIP text encoders (embed_texts) are external pretrained
    # models; we take precomputed text_embeds (supported module path).
    B, _ = text_embeds.shape
    n_conds = len(params["films"])
    if isinstance(hiddens_channel_first, bool):
        hiddens_channel_first = (hiddens_channel_first,) * n_conds
    if isinstance(repeat_batch, int):
        repeat_batch = (repeat_batch,) * n_conds

    # prob_mask_like((batch, 1), 1 - cond_drop_prob)
    if cond_drop_prob == 0.0:
        keep_mask = jnp.ones((B, 1), jnp.float32)
    elif cond_drop_prob == 1.0:
        keep_mask = jnp.zeros((B, 1), jnp.float32)
    else:
        keep_mask = (jax.random.uniform(drop_key, (B, 1)) < (1.0 - cond_drop_prob)
                     ).astype(jnp.float32)

    # one fused small kernel: cond-drop + stem + all FiLM scale/shift MLPs
    scale_shifts = film_mlp_pack(keep_mask, text_embeds, params)

    cond_fns = []
    for (sc, sh), ch_first, r in zip(scale_shifts, hiddens_channel_first, repeat_batch):
        D = sc.shape[-1]
        if ch_first:
            # hoisted packing: (B, 2*D, 1) f32, scale+1 in rows [0:D), shift in [D:2D)
            cond_cf = jnp.concatenate([sc, sh], axis=-1).reshape(B, 2 * D, 1)
            cond_fns.append(partial(film_modulate_channel_first, cond_cf, D, repeat=r))
        else:
            # hoisted packing: lane-dense repack factor k = 128 // gcd(D, 128)
            k = 128 // math.gcd(D, 128)
            cond_cl = jnp.stack([jnp.tile(sc, (1, k)),
                                 jnp.tile(sh, (1, k))], axis=1)      # (B, 2, k*D)
            cond_fns.append(partial(film_modulate_channel_last, cond_cl, D, k, repeat=r))
    return tuple(cond_fns)


# ----------------------------------------------------------------------------
# Pure-JAX reference (mirrors the PyTorch forward) for correctness checking
# ----------------------------------------------------------------------------
def _ref_forward(params, text_embeds, keep_mask, hiddens_list, channel_first_list,
                 repeats):
    x = jnp.where(keep_mask > 0.5, text_embeds, params["null_text_embed"][None, :])
    cond = _silu(x @ params["stem_w"] + params["stem_b"][None, :])
    outs = []
    for fp, hid, ch_first, r in zip(params["films"], hiddens_list,
                                    channel_first_list, repeats):
        c = jnp.repeat(cond, r, axis=0)
        h = _silu(c @ fp["w1"] + fp["b1"][None, :])
        ss = h @ fp["w2"] + fp["b2"][None, :]
        D = ss.shape[-1] // 2
        scale, shift = ss[:, :D], ss[:, D:]
        if ch_first:
            Bb, Dd = hid.shape[0], hid.shape[1]
            spatial = hid.shape[2:]
            hh = hid.reshape(Bb, Dd, -1)
            o = hh * (scale[:, :, None] + 1.0) + shift[:, :, None]
            outs.append(o.reshape(Bb, Dd, *spatial))
        else:
            Bb, Dd = hid.shape[0], hid.shape[-1]
            spatial = hid.shape[1:-1]
            hh = hid.reshape(Bb, -1, Dd)
            o = hh * (scale[:, None, :] + 1.0) + shift[:, None, :]
            outs.append(o.reshape(Bb, *spatial, Dd))
    return outs


if __name__ == "__main__":
    key = jax.random.PRNGKey(0)
    k_param, k_embed, k_h0, k_h1, k_h2, k_h3, k_drop = jax.random.split(key, 7)

    B = 2
    total_latent_dim = 48       # sum of text-model latent dims (synthetic)
    stem_dim = 64               # text_embed_stem_dim
    hidden_dims = (32, 16, 48, 32)
    hiddens_channel_first = (True, False, False, True)
    cond_drop_prob = 0.25

    params = init_text_conditioner_params(k_param, total_latent_dim, stem_dim,
                                          hidden_dims)

    text_embeds = jax.random.normal(k_embed, (B, total_latent_dim), jnp.float32)

    # hiddens to condition:
    #   h0: channel-first tiny spatial (4x4)      -> flattened lane-dense path
    #   h1: channel-last D=16, seq=8              -> repack k=8, KD=128
    #   h2: channel-last D=48, seq=12             -> repack k=8 with pad 12->16, KD=384
    #   h3: channel-first spatial 8x16 (N=128)    -> native (B, D, N) lane path
    hiddens0 = jax.random.normal(k_h0, (B, hidden_dims[0], 4, 4), jnp.float32)
    hiddens1 = jax.random.normal(k_h1, (B, 8, hidden_dims[1]), jnp.float32)
    hiddens2 = jax.random.normal(k_h2, (B, 12, hidden_dims[2]), jnp.float32)
    hiddens3 = jax.random.normal(k_h3, (B, hidden_dims[3], 8, 16), jnp.float32)

    cond_fns = text_conditioner_forward(
        params, text_embeds,
        cond_drop_prob=cond_drop_prob, drop_key=k_drop,
        hiddens_channel_first=hiddens_channel_first, repeat_batch=1)

    hiddens_list = [hiddens0, hiddens1, hiddens2, hiddens3]
    outs = [fn(h) for fn, h in zip(cond_fns, hiddens_list)]
    jax.block_until_ready(outs)

    # correctness vs pure-JAX reference (same keep-mask derivation)
    keep_mask = (jax.random.uniform(k_drop, (B, 1)) < (1.0 - cond_drop_prob)
                 ).astype(jnp.float32)
    refs = _ref_forward(params, text_embeds, keep_mask, hiddens_list,
                        hiddens_channel_first, (1, 1, 1, 1))
    for o, h, r in zip(outs, hiddens_list, refs):
        assert o.shape == h.shape
        np.testing.assert_allclose(np.asarray(o), np.asarray(r), rtol=1e-5, atol=1e-5)

    # repeat_batch handled via the conditioning index_map (b -> b // r)
    hiddens0r = jnp.concatenate([hiddens0, 0.5 * hiddens0], axis=0)  # batch B*2
    cond_fns_r = text_conditioner_forward(
        params, text_embeds,
        cond_drop_prob=cond_drop_prob, drop_key=k_drop,
        hiddens_channel_first=hiddens_channel_first, repeat_batch=(2, 1, 1, 1))
    out0r = cond_fns_r[0](hiddens0r)
    jax.block_until_ready(out0r)
    ref0r = _ref_forward(params, text_embeds, keep_mask,
                         [hiddens0r, hiddens1, hiddens2, hiddens3],
                         hiddens_channel_first, (2, 1, 1, 1))[0]
    np.testing.assert_allclose(np.asarray(out0r), np.asarray(ref0r),
                               rtol=1e-5, atol=1e-5)

    print("KERNEL_OK")
</pallas_src>

<mosaic_0001>
module attributes {stable_mosaic.version = 11 : i64} {
  func.func @kernel(%arg0: memref<2x1xf32, #tpu.memory_space<vmem>>, %arg1: memref<1x48xf32, #tpu.memory_space<vmem>>, %arg2: memref<2x48xf32, #tpu.memory_space<vmem>>, %arg3: memref<48x64xf32, #tpu.memory_space<vmem>>, %arg4: memref<1x64xf32, #tpu.memory_space<vmem>>, %arg5: memref<64x256xf32, #tpu.memory_space<vmem>>, %arg6: memref<1x256xf32, #tpu.memory_space<vmem>>, %arg7: memref<64x64xf32, #tpu.memory_space<vmem>>, %arg8: memref<1x64xf32, #tpu.memory_space<vmem>>, %arg9: memref<32x32xf32, #tpu.memory_space<vmem>>, %arg10: memref<1x32xf32, #tpu.memory_space<vmem>>, %arg11: memref<96x96xf32, #tpu.memory_space<vmem>>, %arg12: memref<1x96xf32, #tpu.memory_space<vmem>>, %arg13: memref<64x64xf32, #tpu.memory_space<vmem>>, %arg14: memref<1x64xf32, #tpu.memory_space<vmem>>, %arg15: memref<2x32xf32, #tpu.memory_space<vmem>>, %arg16: memref<2x32xf32, #tpu.memory_space<vmem>>, %arg17: memref<2x16xf32, #tpu.memory_space<vmem>>, %arg18: memref<2x16xf32, #tpu.memory_space<vmem>>, %arg19: memref<2x48xf32, #tpu.memory_space<vmem>>, %arg20: memref<2x48xf32, #tpu.memory_space<vmem>>, %arg21: memref<2x32xf32, #tpu.memory_space<vmem>>, %arg22: memref<2x32xf32, #tpu.memory_space<vmem>>) attributes {dimension_semantics = [], scalar_prefetch = 0 : i64, scratch_operands = 0 : i64, tpu.core_type = #tpu.core_type<tc>} {
    %c0 = arith.constant 0 : index
    %c0_0 = arith.constant 0 : index
    %0 = vector.load %arg0[%c0, %c0_0] : memref<2x1xf32, #tpu.memory_space<vmem>>, vector<2x1xf32>
    %cst = arith.constant 5.000000e-01 : f32
    %1 = vector.broadcast %cst : f32 to vector<2x1xf32>
    %2 = arith.cmpf ogt, %0, %1 : vector<2x1xf32>
    %c0_1 = arith.constant 0 : index
    %c0_2 = arith.constant 0 : index
    %3 = vector.load %arg2[%c0_1, %c0_2] : memref<2x48xf32, #tpu.memory_space<vmem>>, vector<2x48xf32>
    %c0_3 = arith.constant 0 : index
    %c0_4 = arith.constant 0 : index
    %4 = vector.load %arg1[%c0_3, %c0_4] : memref<1x48xf32, #tpu.memory_space<vmem>>, vector<1x48xf32>
    %5 = vector.shape_cast %2 : vector<2x1xi1> to vector<2x1xi1>
    %6 = vector.broadcast %5 : vector<2x1xi1> to vector<2x48xi1>
    %7 = vector.shape_cast %4 : vector<1x48xf32> to vector<1x48xf32>
    %8 = vector.broadcast %7 : vector<1x48xf32> to vector<2x48xf32>
    %9 = arith.select %6, %3, %8 : vector<2x48xi1>, vector<2x48xf32>
    %c0_5 = arith.constant 0 : index
    %c0_6 = arith.constant 0 : index
    %10 = vector.load %arg3[%c0_5, %c0_6] : memref<48x64xf32, #tpu.memory_space<vmem>>, vector<48x64xf32>
    %cst_7 = arith.constant dense<0.000000e+00> : vector<2x64xf32>
    %11 = tpu.matmul %9, %10, %cst_7 {dimension_numbers = #tpu.dot_dimension_numbers<[1], [0], [0], [1], [0, 0, 1, 1], [], []>} : vector<2x48xf32>, vector<48x64xf32>, vector<2x64xf32> -> vector<2x64xf32>
    %c0_8 = arith.constant 0 : index
    %c0_9 = arith.constant 0 : index
    %12 = vector.load %arg4[%c0_8, %c0_9] : memref<1x64xf32, #tpu.memory_space<vmem>>, vector<1x64xf32>
    %13 = vector.broadcast %12 : vector<1x64xf32> to vector<2x64xf32>
    %14 = arith.addf %11, %13 : vector<2x64xf32>
    %15 = arith.negf %14 : vector<2x64xf32>
    %16 = math.exp %15 : vector<2x64xf32>
    %cst_10 = arith.constant 1.000000e+00 : f32
    %17 = vector.broadcast %cst_10 : f32 to vector<2x64xf32>
    %18 = arith.addf %17, %16 : vector<2x64xf32>
    %19 = arith.divf %17, %18 : vector<2x64xf32>
    %20 = arith.mulf %14, %19 : vector<2x64xf32>
    %c0_11 = arith.constant 0 : index
    %c0_12 = arith.constant 0 : index
    %21 = vector.load %arg5[%c0_11, %c0_12] : memref<64x256xf32, #tpu.memory_space<vmem>>, vector<64x256xf32>
    %cst_13 = arith.constant dense<0.000000e+00> : vector<2x256xf32>
    %22 = tpu.matmul %20, %21, %cst_13 {dimension_numbers = #tpu.dot_dimension_numbers<[1], [0], [0], [1], [0, 0, 1, 1], [], []>} : vector<2x64xf32>, vector<64x256xf32>, vector<2x256xf32> -> vector<2x256xf32>
    %c0_14 = arith.constant 0 : index
    %c0_15 = arith.constant 0 : index
    %23 = vector.load %arg6[%c0_14, %c0_15] : memref<1x256xf32, #tpu.memory_space<vmem>>, vector<1x256xf32>
    %24 = vector.broadcast %23 : vector<1x256xf32> to vector<2x256xf32>
    %25 = arith.addf %22, %24 : vector<2x256xf32>
    %26 = arith.negf %25 : vector<2x256xf32>
    %27 = math.exp %26 : vector<2x256xf32>
    %cst_16 = arith.constant 1.000000e+00 : f32
    %28 = vector.broadcast %cst_16 : f32 to vector<2x256xf32>
    %29 = arith.addf %28, %27 : vector<2x256xf32>
    %30 = arith.divf %28, %29 : vector<2x256xf32>
    %31 = arith.mulf %25, %30 : vector<2x256xf32>
    %32 = vector.extract_strided_slice %31 {offsets = [0, 0], sizes = [2, 64], strides = [1, 1]} : vector<2x256xf32> to vector<2x64xf32>
    %c0_17 = arith.constant 0 : index
    %c0_18 = arith.constant 0 : index
    %33 = vector.load %arg7[%c0_17, %c0_18] : memref<64x64xf32, #tpu.memory_space<vmem>>, vector<64x64xf32>
    %cst_19 = arith.constant dense<0.000000e+00> : vector<2x64xf32>
    %34 = tpu.matmul %32, %33, %cst_19 {dimension_numbers = #tpu.dot_dimension_numbers<[1], [0], [0], [1], [0, 0, 1, 1], [], []>} : vector<2x64xf32>, vector<64x64xf32>, vector<2x64xf32> -> vector<2x64xf32>
    %c0_20 = arith.constant 0 : index
    %c0_21 = arith.constant 0 : index
    %35 = vector.load %arg8[%c0_20, %c0_21] : memref<1x64xf32, #tpu.memory_space<vmem>>, vector<1x64xf32>
    %36 = vector.broadcast %35 : vector<1x64xf32> to vector<2x64xf32>
    %37 = arith.addf %34, %36 : vector<2x64xf32>
    %38 = vector.extract_strided_slice %37 {offsets = [0, 0], sizes = [2, 32], strides = [1, 1]} : vector<2x64xf32> to vector<2x32xf32>
    %cst_22 = arith.constant 1.000000e+00 : f32
    %39 = vector.broadcast %cst_22 : f32 to vector<2x32xf32>
    %40 = arith.addf %38, %39 : vector<2x32xf32>
    %c0_23 = arith.constant 0 : index
    %c0_24 = arith.constant 0 : index
    %41 = vector.load %arg15[%c0_23, %c0_24] : memref<2x32xf32, #tpu.memory_space<vmem>>, vector<2x32xf32>
    tpu.vector_store %arg15[%c0_23, %c0_24], %40 {strides = array<i32>} : memref<2x32xf32, #tpu.memory_space<vmem>>, vector<2x32xf32>,
    %42 = vector.extract_strided_slice %37 {offsets = [0, 32], sizes = [2, 32], strides = [1, 1]} : vector<2x64xf32> to vector<2x32xf32>
    %c0_25 = arith.constant 0 : index
    %c0_26 = arith.constant 0 : index
    %43 = vector.load %arg16[%c0_25, %c0_26] : memref<2x32xf32, #tpu.memory_space<vmem>>, vector<2x32xf32>
    tpu.vector_store %arg16[%c0_25, %c0_26], %42 {strides = array<i32>} : memref<2x32xf32, #tpu.memory_space<vmem>>, vector<2x32xf32>,
    %44 = vector.extract_strided_slice %31 {offsets = [0, 64], sizes = [2, 32], strides = [1, 1]} : vector<2x256xf32> to vector<2x32xf32>
    %c0_27 = arith.constant 0 : index
    %c0_28 = arith.constant 0 : index
    %45 = vector.load %arg9[%c0_27, %c0_28] : memref<32x32xf32, #tpu.memory_space<vmem>>, vector<32x32xf32>
    %cst_29 = arith.constant dense<0.000000e+00> : vector<2x32xf32>
    %46 = tpu.matmul %44, %45, %cst_29 {dimension_numbers = #tpu.dot_dimension_numbers<[1], [0], [0], [1], [0, 0, 1, 1], [], []>} : vector<2x32xf32>, vector<32x32xf32>, vector<2x32xf32> -> vector<2x32xf32>
    %c0_30 = arith.constant 0 : index
    %c0_31 = arith.constant 0 : index
    %47 = vector.load %arg10[%c0_30, %c0_31] : memref<1x32xf32, #tpu.memory_space<vmem>>, vector<1x32xf32>
    %48 = vector.broadcast %47 : vector<1x32xf32> to vector<2x32xf32>
    %49 = arith.addf %46, %48 : vector<2x32xf32>
    %50 = vector.extract_strided_slice %49 {offsets = [0, 0], sizes = [2, 16], strides = [1, 1]} : vector<2x32xf32> to vector<2x16xf32>
    %cst_32 = arith.constant 1.000000e+00 : f32
    %51 = vector.broadcast %cst_32 : f32 to vector<2x16xf32>
    %52 = arith.addf %50, %51 : vector<2x16xf32>
    %c0_33 = arith.constant 0 : index
    %c0_34 = arith.constant 0 : index
    %53 = vector.load %arg17[%c0_33, %c0_34] : memref<2x16xf32, #tpu.memory_space<vmem>>, vector<2x16xf32>
    tpu.vector_store %arg17[%c0_33, %c0_34], %52 {strides = array<i32>} : memref<2x16xf32, #tpu.memory_space<vmem>>, vector<2x16xf32>,
    %54 = vector.extract_strided_slice %49 {offsets = [0, 16], sizes = [2, 16], strides = [1, 1]} : vector<2x32xf32> to vector<2x16xf32>
    %c0_35 = arith.constant 0 : index
    %c0_36 = arith.constant 0 : index
    %55 = vector.load %arg18[%c0_35, %c0_36] : memref<2x16xf32, #tpu.memory_space<vmem>>, vector<2x16xf32>
    tpu.vector_store %arg18[%c0_35, %c0_36], %54 {strides = array<i32>} : memref<2x16xf32, #tpu.memory_space<vmem>>, vector<2x16xf32>,
    %56 = vector.extract_strided_slice %31 {offsets = [0, 96], sizes = [2, 96], strides = [1, 1]} : vector<2x256xf32> to vector<2x96xf32>
    %c0_37 = arith.constant 0 : index
    %c0_38 = arith.constant 0 : index
    %57 = vector.load %arg11[%c0_37, %c0_38] : memref<96x96xf32, #tpu.memory_space<vmem>>, vector<96x96xf32>
    %cst_39 = arith.constant dense<0.000000e+00> : vector<2x96xf32>
    %58 = tpu.matmul %56, %57, %cst_39 {dimension_numbers = #tpu.dot_dimension_numbers<[1], [0], [0], [1], [0, 0, 1, 1], [], []>} : vector<2x96xf32>, vector<96x96xf32>, vector<2x96xf32> -> vector<2x96xf32>
    %c0_40 = arith.constant 0 : index
    %c0_41 = arith.constant 0 : index
    %59 = vector.load %arg12[%c0_40, %c0_41] : memref<1x96xf32, #tpu.memory_space<vmem>>, vector<1x96xf32>
    %60 = vector.broadcast %59 : vector<1x96xf32> to vector<2x96xf32>
    %61 = arith.addf %58, %60 : vector<2x96xf32>
    %62 = vector.extract_strided_slice %61 {offsets = [0, 0], sizes = [2, 48], strides = [1, 1]} : vector<2x96xf32> to vector<2x48xf32>
    %cst_42 = arith.constant 1.000000e+00 : f32
    %63 = vector.broadcast %cst_42 : f32 to vector<2x48xf32>
    %64 = arith.addf %62, %63 : vector<2x48xf32>
    %c0_43 = arith.constant 0 : index
    %c0_44 = arith.constant 0 : index
    %65 = vector.load %arg19[%c0_43, %c0_44] : memref<2x48xf32, #tpu.memory_space<vmem>>, vector<2x48xf32>
    tpu.vector_store %arg19[%c0_43, %c0_44], %64 {strides = array<i32>} : memref<2x48xf32, #tpu.memory_space<vmem>>, vector<2x48xf32>,
    %66 = vector.extract_strided_slice %61 {offsets = [0, 48], sizes = [2, 48], strides = [1, 1]} : vector<2x96xf32> to vector<2x48xf32>
    %c0_45 = arith.constant 0 : index
    %c0_46 = arith.constant 0 : index
    %67 = vector.load %arg20[%c0_45, %c0_46] : memref<2x48xf32, #tpu.memory_space<vmem>>, vector<2x48xf32>
    tpu.vector_store %arg20[%c0_45, %c0_46], %66 {strides = array<i32>} : memref<2x48xf32, #tpu.memory_space<vmem>>, vector<2x48xf32>,
    %68 = vector.extract_strided_slice %31 {offsets = [0, 192], sizes = [2, 64], strides = [1, 1]} : vector<2x256xf32> to vector<2x64xf32>
    %c0_47 = arith.constant 0 : index
    %c0_48 = arith.constant 0 : index
    %69 = vector.load %arg13[%c0_47, %c0_48] : memref<64x64xf32, #tpu.memory_space<vmem>>, vector<64x64xf32>
    %cst_49 = arith.constant dense<0.000000e+00> : vector<2x64xf32>
    %70 = tpu.matmul %68, %69, %cst_49 {dimension_numbers = #tpu.dot_dimension_numbers<[1], [0], [0], [1], [0, 0, 1, 1], [], []>} : vector<2x64xf32>, vector<64x64xf32>, vector<2x64xf32> -> vector<2x64xf32>
    %c0_50 = arith.constant 0 : index
    %c0_51 = arith.constant 0 : index
    %71 = vector.load %arg14[%c0_50, %c0_51] : memref<1x64xf32, #tpu.memory_space<vmem>>, vector<1x64xf32>
    %72 = vector.broadcast %71 : vector<1x64xf32> to vector<2x64xf32>
    %73 = arith.addf %70, %72 : vector<2x64xf32>
    %74 = vector.extract_strided_slice %73 {offsets = [0, 0], sizes = [2, 32], strides = [1, 1]} : vector<2x64xf32> to vector<2x32xf32>
    %cst_52 = arith.constant 1.000000e+00 : f32
    %75 = vector.broadcast %cst_52 : f32 to vector<2x32xf32>
    %76 = arith.addf %74, %75 : vector<2x32xf32>
    %c0_53 = arith.constant 0 : index
    %c0_54 = arith.constant 0 : index
    %77 = vector.load %arg21[%c0_53, %c0_54] : memref<2x32xf32, #tpu.memory_space<vmem>>, vector<2x32xf32>
    tpu.vector_store %arg21[%c0_53, %c0_54], %76 {strides = array<i32>} : memref<2x32xf32, #tpu.memory_space<vmem>>, vector<2x32xf32>,
    %78 = vector.extract_strided_slice %73 {offsets = [0, 32], sizes = [2, 32], strides = [1, 1]} : vector<2x64xf32> to vector<2x32xf32>
    %c0_55 = arith.constant 0 : index
    %c0_56 = arith.constant 0 : index
    %79 = vector.load %arg22[%c0_55, %c0_56] : memref<2x32xf32, #tpu.memory_space<vmem>>, vector<2x32xf32>
    tpu.vector_store %arg22[%c0_55, %c0_56], %78 {strides = array<i32>} : memref<2x32xf32, #tpu.memory_space<vmem>>, vector<2x32xf32>,
    return
  }
}

</mosaic_0001>

<llo_original>
// kernel: tpu_custom_call.1
$region0: #{tpu_custom_call.1}
  #allocation0 [shape = 'u32[]', space=smem, size = 0x4, offset = 0x4, fixed_abs, tag = 'smem constant byte address 0x4 - core index']
  #allocation1 [shape = 'u32[144,128]{1,0:T(1,128)}', space=vmem, size = 0x12000, scoped, tag = 'internal scratch']
  %s0 = inlined_call_operand.vmem [shape: f32[2,1], index: 0, kind: input, shape index: {}]
  %s1 = inlined_call_operand.vmem [shape: f32[1,48], index: 1, kind: input, shape index: {}]
  %s2 = inlined_call_operand.vmem [shape: f32[2,48], index: 2, kind: input, shape index: {}]
  %s3 = inlined_call_operand.hbm [shape: f32[48,64], index: 3, kind: input, shape index: {}]
  %s4 = inlined_call_operand.hbm [shape: f32[1,64], index: 4, kind: input, shape index: {}]
  %s5 = inlined_call_operand.hbm [shape: f32[64,256], index: 5, kind: input, shape index: {}]
  %s6 = inlined_call_operand.vmem [shape: f32[1,256], index: 6, kind: input, shape index: {}]
  %s7 = inlined_call_operand.hbm [shape: f32[64,64], index: 7, kind: input, shape index: {}]
  %s8 = inlined_call_operand.hbm [shape: f32[1,64], index: 8, kind: input, shape index: {}]
  %s9 = inlined_call_operand.vmem [shape: f32[32,32], index: 9, kind: input, shape index: {}]
  %s10 = inlined_call_operand.vmem [shape: f32[1,32], index: 10, kind: input, shape index: {}]
  %s11 = inlined_call_operand.hbm [shape: f32[96,96], index: 11, kind: input, shape index: {}]
  %s12 = inlined_call_operand.vmem [shape: f32[1,96], index: 12, kind: input, shape index: {}]
  %s13 = inlined_call_operand.hbm [shape: f32[64,64], index: 13, kind: input, shape index: {}]
  %s14 = inlined_call_operand.vmem [shape: f32[1,64], index: 14, kind: input, shape index: {}]
  %s15 = inlined_call_operand.hbm [shape: f32[2,32], index: 15, kind: output, shape index: {0}]
  %s16 = inlined_call_operand.hbm [shape: f32[2,32], index: 16, kind: output, shape index: {1}]
  %s17 = inlined_call_operand.hbm [shape: f32[2,16], index: 17, kind: output, shape index: {2}]
  %s18 = inlined_call_operand.hbm [shape: f32[2,16], index: 18, kind: output, shape index: {3}]
  %s19 = inlined_call_operand.hbm [shape: f32[2,48], index: 19, kind: output, shape index: {4}]
  %s20 = inlined_call_operand.hbm [shape: f32[2,48], index: 20, kind: output, shape index: {5}]
  %s21 = inlined_call_operand.hbm [shape: f32[2,32], index: 21, kind: output, shape index: {6}]
  %s22 = inlined_call_operand.hbm [shape: f32[2,32], index: 22, kind: output, shape index: {7}]
  %23 = xla_tuple %s15, %s16, %s17, %s18, %s19, %s20, %s21, %s22
  %s24 = sld [smem:[#allocation0]]
  $region154: #{tpu_custom_call.1} parent=0
    _
  %s26 = ssub.s32 1, %s24
  %s27 = scalar_select 0, %s26, %s24
  $region1: #{tpu_custom_call.1} parent=0
    #allocation2 [shape = 'u8[24576]{0}', space=vmem, size = 0x6000, scoped, tag = 'input window, operand 3, single buffered']
    #allocation3 [shape = 's32[1]{0}', space=sflag, size = 0x4, scoped, tag = 'scoped memory for tpu_custom_call.1']
    #allocation4 [shape = 's32[1]{0}', space=sflag, size = 0x4, scoped, tag = 'scoped memory for tpu_custom_call.1']
    #allocation5 [shape = 'u8[512]{0}', space=vmem, size = 0x400, scoped, tag = 'input window, operand 4, single buffered']
    #allocation6 [shape = 's32[1]{0}', space=sflag, size = 0x4, scoped, tag = 'scoped memory for tpu_custom_call.1']
    #allocation7 [shape = 'u8[65536]{0}', space=vmem, size = 0x10000, scoped, tag = 'input window, operand 5, single buffered']
    #allocation8 [shape = 'u8[32768]{0}', space=vmem, size = 0x8000, scoped, tag = 'input window, operand 7, single buffered']
    #allocation9 [shape = 's32[1]{0}', space=sflag, size = 0x4, scoped, tag = 'scoped memory for tpu_custom_call.1']
    #allocation10 [shape = 'u8[512]{0}', space=vmem, size = 0x400, scoped, tag = 'input window, operand 8, single buffered']
    #allocation11 [shape = 'u8[49152]{0}', space=vmem, size = 0xc000, scoped, tag = 'input window, operand 11, single buffered']
    #allocation12 [shape = 's32[1]{0}', space=sflag, size = 0x4, scoped, tag = 'scoped memory for tpu_custom_call.1']
    #allocation13 [shape = 'u8[32768]{0}', space=vmem, size = 0x8000, scoped, tag = 'input window, operand 13, single buffered']
    #allocation14 [shape = 'u8[1024]{0}', space=vmem, size = 0x400, scoped, tag = 'output window, operand 0, single buffered']
    #allocation15 [shape = 'u8[1024]{0}', space=vmem, size = 0x400, scoped, tag = 'output window, operand 1, single buffered']
    #allocation16 [shape = 's32[1]{0}', space=sflag, size = 0x4, scoped, tag = 'scoped memory for tpu_custom_call.1']
    #allocation17 [shape = 'u8[1024]{0}', space=vmem, size = 0x400, scoped, tag = 'output window, operand 2, single buffered']
    #allocation18 [shape = 'u8[1024]{0}', space=vmem, size = 0x400, scoped, tag = 'output window, operand 3, single buffered']
    #allocation19 [shape = 's32[1]{0}', space=sflag, size = 0x4, scoped, tag = 'scoped memory for tpu_custom_call.1']
    #allocation20 [shape = 'u8[1024]{0}', space=vmem, size = 0x400, scoped, tag = 'output window, operand 4, single buffered']
    #allocation21 [shape = 'u8[1024]{0}', space=vmem, size = 0x400, scoped, tag = 'output window, operand 5, single buffered']
    #allocation22 [shape = 's32[1]{0}', space=sflag, size = 0x4, scoped, tag = 'scoped memory for tpu_custom_call.1']
    #allocation23 [shape = 'u8[1024]{0}', space=vmem, size = 0x400, scoped, tag = 'output window, operand 6, single buffered']
    #allocation24 [shape = 'u8[1024]{0}', space=vmem, size = 0x400, scoped, tag = 'output window, operand 7, single buffered']
    #allocation25 [shape = 's32[1]{0}', space=sflag, size = 0x4, scoped, tag = 'scoped memory for tpu_custom_call.1']
    %28 = vsyncpa [#allocation3], 0
    %29 = vsyncpa [#allocation6], 0
    %30 = vsyncpa [#allocation9], 0
    %31 = vsyncpa [#allocation12], 0
    %32 = vsyncpa [#allocation4], 0
    %33 = vsyncpa [#allocation16], 0
    %34 = vsyncpa [#allocation19], 0
    %35 = vsyncpa [#allocation22], 0
    %36 = vsyncpa [#allocation25], 0
    // Predicated region
    $region2: #{tpu_custom_call.1} parent=1 // pred_check
      _
    $region3: #{tpu_custom_call.1} parent=1 // pred_check_branch
      %38 = sbr.rel (0) target = $region5
    $region4: #{tpu_custom_call.1} parent=1 // pred_region
      _
    $region5: #{tpu_custom_call.1} parent=1 // pred_fallthru
      _
    // Predicated region
    $region6: #{tpu_custom_call.1} parent=1 // pred_check
      _
    $region7: #{tpu_custom_call.1} parent=1 // pred_check_branch
      %40 = sbr.rel (0) target = $region9
    $region8: #{tpu_custom_call.1} parent=1 // pred_region
      _
    $region9: #{tpu_custom_call.1} parent=1 // pred_fallthru
      _
    // Predicated region
    $region10: #{tpu_custom_call.1} parent=1 // pred_check
      _
    $region11: #{tpu_custom_call.1} parent=1 // pred_check_branch
      %42 = sbr.rel (0) target = $region13
    $region12: #{tpu_custom_call.1} parent=1 // pred_region
      _
    $region13: #{tpu_custom_call.1} parent=1 // pred_fallthru
      _
    // Predicated region
    $region14: #{tpu_custom_call.1} parent=1 // pred_check
      _
    $region15: #{tpu_custom_call.1} parent=1 // pred_check_branch
      %44 = sbr.rel (0) target = $region17
    $region16: #{tpu_custom_call.1} parent=1 // pred_region
      %s46 = ssub.s32 768, 768
      %47 = vsyncadd [#allocation3], %s46
      %s48 = sshll.u32 [#allocation2], 4
      %s49 = int_to_ptr.vmem [resolvable:$true] %s48
      %54 = dma.hbm_to_vmem [thread:$0]  %s3, 768, %s49, [#allocation3], 128, 128, 8
    $region17: #{tpu_custom_call.1} parent=1 // pred_fallthru
      _
    // Predicated region
    $region18: #{tpu_custom_call.1} parent=1 // pred_check
      _
    $region19: #{tpu_custom_call.1} parent=1 // pred_check_branch
      %56 = sbr.rel (0) target = $region21
    $region20: #{tpu_custom_call.1} parent=1 // pred_region
      %s58 = ssub.s32 16, 16
      %59 = vsyncadd [#allocation6], %s58
      %s61 = sshll.u32 [#allocation5], 4
      %s62 = int_to_ptr.vmem [resolvable:$true] %s61
      %64 = dma.hbm_to_vmem [thread:$0]  %s4, 16, %s62, [#allocation6]
    $region21: #{tpu_custom_call.1} parent=1 // pred_fallthru
      _
    // Predicated region
    $region22: #{tpu_custom_call.1} parent=1 // pred_check
      _
    $region23: #{tpu_custom_call.1} parent=1 // pred_check_branch
      %66 = sbr.rel (0) target = $region25
    $region24: #{tpu_custom_call.1} parent=1 // pred_region
      %s68 = ssub.s32 2048, 2048
      %69 = vsyncadd [#allocation6], %s68
      %s70 = sshll.u32 [#allocation7], 4
      %s71 = int_to_ptr.vmem [resolvable:$true] %s70
      %76 = dma.hbm_to_vmem [thread:$0]  %s5, 2048, %s71, [#allocation6], 256, 256, 16
    $region25: #{tpu_custom_call.1} parent=1 // pred_fallthru
      _
    // Predicated region
    $region26: #{tpu_custom_call.1} parent=1 // pred_check
      _
    $region27: #{tpu_custom_call.1} parent=1 // pred_check_branch
      %78 = sbr.rel (0) target = $region29
    $region28: #{tpu_custom_call.1} parent=1 // pred_region
      _
    $region29: #{tpu_custom_call.1} parent=1 // pred_fallthru
      _
    // Predicated region
    $region30: #{tpu_custom_call.1} parent=1 // pred_check
      _
    $region31: #{tpu_custom_call.1} parent=1 // pred_check_branch
      %80 = sbr.rel (0) target = $region33
    $region32: #{tpu_custom_call.1} parent=1 // pred_region
      %s82 = ssub.s32 1024, 1024
      %83 = vsyncadd [#allocation9], %s82
      %s84 = sshll.u32 [#allocation8], 4
      %s85 = int_to_ptr.vmem [resolvable:$true] %s84
      %90 = dma.hbm_to_vmem [thread:$0]  %s7, 1024, %s85, [#allocation9], 128, 128, 8
    $region33: #{tpu_custom_call.1} parent=1 // pred_fallthru
      _
    // Predicated region
    $region34: #{tpu_custom_call.1} parent=1 // pred_check
      _
    $region35: #{tpu_custom_call.1} parent=1 // pred_check_branch
      %92 = sbr.rel (0) target = $region37
    $region36: #{tpu_custom_call.1} parent=1 // pred_region
      %s94 = ssub.s32 16, 16
      %95 = vsyncadd [#allocation9], %s94
      %s97 = sshll.u32 [#allocation10], 4
      %s98 = int_to_ptr.vmem [resolvable:$true] %s97
      %100 = dma.hbm_to_vmem [thread:$0]  %s8, 16, %s98, [#allocation9]
    $region37: #{tpu_custom_call.1} parent=1 // pred_fallthru
      _
    // Predicated region
    $region38: #{tpu_custom_call.1} parent=1 // pred_check
      _
    $region39: #{tpu_custom_call.1} parent=1 // pred_check_branch
      %102 = sbr.rel (0) target = $region41
    $region40: #{tpu_custom_call.1} parent=1 // pred_region
      _
    $region41: #{tpu_custom_call.1} parent=1 // pred_fallthru
      _
    // Predicated region
    $region42: #{tpu_custom_call.1} parent=1 // pred_check
      _
    $region43: #{tpu_custom_call.1} parent=1 // pred_check_branch
      %104 = sbr.rel (0) target = $region45
    $region44: #{tpu_custom_call.1} parent=1 // pred_region
      _
    $region45: #{tpu_custom_call.1} parent=1 // pred_fallthru
      _
    // Predicated region
    $region46: #{tpu_custom_call.1} parent=1 // pred_check
      _
    $region47: #{tpu_custom_call.1} parent=1 // pred_check_branch
      %106 = sbr.rel (0) target = $region49
    $region48: #{tpu_custom_call.1} parent=1 // pred_region
      %s108 = ssub.s32 1536, 1536
      %109 = vsyncadd [#allocation12], %s108
      %s110 = sshll.u32 [#allocation11], 4
      %s111 = int_to_ptr.vmem [resolvable:$true] %s110
      %116 = dma.hbm_to_vmem [thread:$0]  %s11, 1536, %s111, [#allocation12], 128, 128, 8
    $region49: #{tpu_custom_call.1} parent=1 // pred_fallthru
      _
    // Predicated region
    $region50: #{tpu_custom_call.1} parent=1 // pred_check
      _
    $region51: #{tpu_custom_call.1} parent=1 // pred_check_branch
      %118 = sbr.rel (0) target = $region53
    $region52: #{tpu_custom_call.1} parent=1 // pred_region
      _
    $region53: #{tpu_custom_call.1} parent=1 // pred_fallthru
      _
    // Predicated region
    $region54: #{tpu_custom_call.1} parent=1 // pred_check
      _
    $region55: #{tpu_custom_call.1} parent=1 // pred_check_branch
      %120 = sbr.rel (0) target = $region57
    $region56: #{tpu_custom_call.1} parent=1 // pred_region
      %s122 = ssub.s32 1024, 1024
      %123 = vsyncadd [#allocation12], %s122
      %s124 = sshll.u32 [#allocation13], 4
      %s125 = int_to_ptr.vmem [resolvable:$true] %s124
      %130 = dma.hbm_to_vmem [thread:$0]  %s13, 1024, %s125, [#allocation12], 128, 128, 8
    $region57: #{tpu_custom_call.1} parent=1 // pred_fallthru
      _
    // Predicated region
    $region58: #{tpu_custom_call.1} parent=1 // pred_check
      _
    $region59: #{tpu_custom_call.1} parent=1 // pred_check_branch
      %132 = sbr.rel (0) target = $region61
    $region60: #{tpu_custom_call.1} parent=1 // pred_region
      _
    $region61: #{tpu_custom_call.1} parent=1 // pred_fallthru
      _
    // Predicated region
    $region62: #{tpu_custom_call.1} parent=1 // pred_check
      _
    $region63: #{tpu_custom_call.1} parent=1 // pred_check_branch
      %134 = sbr.rel (0) target = $region65
    $region64: #{tpu_custom_call.1} parent=1 // pred_region
      %135 = dma.done [#allocation3], 768
    $region65: #{tpu_custom_call.1} parent=1 // pred_fallthru
      _
    // Predicated region
    $region66: #{tpu_custom_call.1} parent=1 // pred_check
      _
    $region67: #{tpu_custom_call.1} parent=1 // pred_check_branch
      %137 = sbr.rel (0) target = $region69
    $region68: #{tpu_custom_call.1} parent=1 // pred_region
      %138 = dma.done [#allocation6], 16
    $region69: #{tpu_custom_call.1} parent=1 // pred_fallthru
      _
    // Predicated region
    $region70: #{tpu_custom_call.1} parent=1 // pred_check
      _
    $region71: #{tpu_custom_call.1} parent=1 // pred_check_branch
      %140 = sbr.rel (0) target = $region73
    $region72: #{tpu_custom_call.1} parent=1 // pred_region
      %141 = dma.done [#allocation6], 2048
    $region73: #{tpu_custom_call.1} parent=1 // pred_fallthru
      _
    // Predicated region
    $region74: #{tpu_custom_call.1} parent=1 // pred_check
      _
    $region75: #{tpu_custom_call.1} parent=1 // pred_check_branch
      %143 = sbr.rel (0) target = $region77
    $region76: #{tpu_custom_call.1} parent=1 // pred_region
      %144 = dma.done [#allocation9], 1024
    $region77: #{tpu_custom_call.1} parent=1 // pred_fallthru
      _
    // Predicated region
    $region78: #{tpu_custom_call.1} parent=1 // pred_check
      _
    $region79: #{tpu_custom_call.1} parent=1 // pred_check_branch
      %146 = sbr.rel (0) target = $region81
    $region80: #{tpu_custom_call.1} parent=1 // pred_region
      %147 = dma.done [#allocation9], 16
    $region81: #{tpu_custom_call.1} parent=1 // pred_fallthru
      _
    // Predicated region
    $region82: #{tpu_custom_call.1} parent=1 // pred_check
      _
    $region83: #{tpu_custom_call.1} parent=1 // pred_check_branch
      %149 = sbr.rel (0) target = $region85
    $region84: #{tpu_custom_call.1} parent=1 // pred_region
      %150 = dma.done [#allocation12], 1536
    $region85: #{tpu_custom_call.1} parent=1 // pred_fallthru
      _
    // Predicated region
    $region86: #{tpu_custom_call.1} parent=1 // pred_check
      _
    $region87: #{tpu_custom_call.1} parent=1 // pred_check_branch
      %152 = sbr.rel (0) target = $region89
    $region88: #{tpu_custom_call.1} parent=1 // pred_region
      %153 = dma.done [#allocation12], 1024
    $region89: #{tpu_custom_call.1} parent=1 // pred_fallthru
      _
    %v154 = vld [vmem:[%s0] sm:$0x3]
    %vm155 = vcmp.gt.f32.partialorder %v154, 0.5
    %v156 = vld [vmem:[%s2] sm:$0x3]
    %v157 = vld [vmem:[%s1] sm:$0x1]
    %v158 = vsel %vm155, 1, 0
    %159 = vset.pattern.permute.xlu0 0
    %160 = vperm.xlu0 %159, %v158
    %v161 = vpop.permute.xlu0 %160
    %vm162 = vcmp.eq.s32.totalorder %v161, 1
    %v164 = vlaneseq
    %v165 = vshrl.u32 %v164, 7
    %v166 = vsub.s32 0, %v165
    %v167 = vrot.slane %v157, %v166
    %v169 = vsel %vm162, %v156, %v167
    %v170 = vld [vmem:[#allocation2] sm:$0xff]
    %v171 = vld [vmem:[#allocation2 + $0x8] sm:$0xff]
    %v172 = vld [vmem:[#allocation2 + $0x10] sm:$0xff]
    %v173 = vld [vmem:[#allocation2 + $0x18] sm:$0xff]
    %v174 = vld [vmem:[#allocation2 + $0x20] sm:$0xff]
    %v175 = vld [vmem:[#allocation2 + $0x28] sm:$0xff]
    %v176 = vld [vmem:[#allocation5] sm:$0x1]
    %v178 = vlaneseq
    %v179 = vshrl.u32 %v178, 7
    %v180 = vsub.s32 0, %v179
    %v181 = vrot.slane %v176, %v180
    %vm183 = vcmask 392192
    %v185 = vsel %vm183, %v169, 0
    %187 = vmatprep.subr.mxu0 0.0
    %188 = vmatpush1.msra.mxu0 %v170
    %189 = vmatprep.subr.mxu0 0.0
    %190 = vmatpush1.msra.mxu0 %v171
    %191 = vmatprep.subr.mxu0 0.0
    %192 = vmatpush1.msra.mxu0 %v172
    %193 = vmatprep.subr.mxu0 0.0
    %194 = vmatpush1.msra.mxu0 %v173
    %195 = vmatprep.subr.mxu0 0.0
    %196 = vmatpush1.msra.mxu0 %v174
    %197 = vmatprep.subr.mxu0 0.0
    %198 = vmatpush1.msra.mxu0 %v175
    %199 = vmatprep.subr.mxu0 0.0
    %200 = vmatpush1.msra.mxu0 0.0
    %201 = vmatprep.subr.mxu0 0.0
    %202 = vmatpush1.msra.mxu0 0.0
    %203 = vmatprep.subr.mxu0 0.0
    %204 = vmatpush1.msra.mxu0 0.0
    %205 = vmatprep.subr.mxu0 0.0
    %206 = vmatpush1.msra.mxu0 0.0
    %207 = vmatprep.subr.mxu0 0.0
    %208 = vmatpush1.msra.mxu0 0.0
    %209 = vmatprep.subr.mxu0 0.0
    %210 = vmatpush1.msra.mxu0 0.0
    %211 = vmatprep.subr.mxu0 0.0
    %212 = vmatpush1.msra.mxu0 0.0
    %213 = vmatprep.subr.mxu0 0.0
    %214 = vmatpush1.msra.mxu0 0.0
    %215 = vmatprep.subr.mxu0 0.0
    %216 = vmatpush1.msra.mxu0 0.0
    %217 = vmatprep.subr.mxu0 0.0
    %218 = vmatpush1.msra.mxu0 0.0
    %219 = vmatprep.subr.mxu0 0.0
    %220 = vmatpush1.msra.mxu0 0.0
    %221 = vmatprep.subr.mxu0 0.0
    %222 = vmatpush1.msra.mxu0 0.0
    %223 = vmatprep.subr.mxu0 0.0
    %224 = vmatpush1.msra.mxu0 0.0
    %225 = vmatprep.subr.mxu0 0.0
    %226 = vmatpush1.msra.mxu0 0.0
    %227 = vmatprep.subr.mxu0 0.0
    %228 = vmatpush1.msra.mxu0 0.0
    %229 = vmatprep.subr.mxu0 0.0
    %230 = vmatpush1.msra.mxu0 0.0
    %231 = vmatprep.subr.mxu0 0.0
    %232 = vmatpush1.msra.mxu0 0.0
    %233 = vmatprep.subr.mxu0 0.0
    %234 = vmatpush1.msra.mxu0 0.0
    %235 = vmatprep.subr.mxu0 0.0
    %236 = vmatpush1.msra.mxu0 0.0
    %237 = vmatprep.subr.mxu0 0.0
    %238 = vmatpush1.msra.mxu0 0.0
    %239 = vmatprep.subr.mxu0 0.0
    %240 = vmatpush1.msra.mxu0 0.0
    %241 = vmatprep.subr.mxu0 0.0
    %242 = vmatpush1.msra.mxu0 0.0
    %243 = vmatprep.subr.mxu0 0.0
    %244 = vmatpush1.msra.mxu0 0.0
    %245 = vmatprep.subr.mxu0 0.0
    %246 = vmatpush1.msra.mxu0 0.0
    %247 = vmatprep.subr.mxu0 0.0
    %248 = vmatpush1.msra.mxu0 0.0
    %249 = vmatprep.subr.mxu0 0.0
    %250 = vmatpush1.msra.mxu0 0.0
    %251 = vmatprep.mubr.f32.mxu0 0.0
    %252 = vmatmul.mubr.f32.gmra.mrb[0].mxu0 %v185
    %v253 = vpop.f32.mrb[0].mxu0
    %v254 = vadd.f32 %v181, %v253
    %v255 = vpop.f32.mrb[0].mxu0
    %256 = vdwg.mxu0
    %v257 = vxor.u32 %v254, 2147483648
    %v258 = vmul.f32 %v257, 1.442695
    %v259 = vpow.pop %v258
    %v260 = vadd.f32 %v259, 1.0
    %v261 = vrcp.pop %v260
    %v262 = vmul.f32 1.0, %v261
    %v263 = vmul.f32 %v254, %v262
    %v264 = vld [vmem:[#allocation7] sm:$0xff]
    %v265 = vld [vmem:[#allocation7 + $0x8] sm:$0xff]
    %v266 = vld [vmem:[#allocation7 + $0x10] sm:$0xff]
    %v267 = vld [vmem:[#allocation7 + $0x18] sm:$0xff]
    %v268 = vld [vmem:[#allocation7 + $0x20] sm:$0xff]
    %v269 = vld [vmem:[#allocation7 + $0x28] sm:$0xff]
    %v270 = vld [vmem:[#allocation7 + $0x30] sm:$0xff]
    %v271 = vld [vmem:[#allocation7 + $0x38] sm:$0xff]
    %v272 = vld [vmem:[#allocation7 + $0x40] sm:$0xff]
    %v273 = vld [vmem:[#allocation7 + $0x48] sm:$0xff]
    %v274 = vld [vmem:[#allocation7 + $0x50] sm:$0xff]
    %v275 = vld [vmem:[#allocation7 + $0x58] sm:$0xff]
    %v276 = vld [vmem:[#allocation7 + $0x60] sm:$0xff]
    %v277 = vld [vmem:[#allocation7 + $0x68] sm:$0xff]
    %v278 = vld [vmem:[#allocation7 + $0x70] sm:$0xff]
    %v279 = vld [vmem:[#allocation7 + $0x78] sm:$0xff]
    %v280 = vld [vmem:[%s6] sm:$0x3]
    %v282 = vlaneseq
    %v283 = vshrl.u32 %v282, 7
    %v284 = vsub.s32 0, %v283
    %v285 = vrot.slane %v280, %v284
    %v286 = vlaneseq
    %v287 = vshrl.u32 %v286, 7
    %v288 = vsub.s32 1, %v287
    %v289 = vrot.slane %v280, %v288
    %vm292 = vcmask 523264
    %v294 = vsel %vm292, %v263, 0
    %296 = vmatprep.subr.mxu0 %v265
    %297 = vmatpush1.msra.mxu0 %v264
    %298 = vmatprep.subr.mxu0 %v267
    %299 = vmatpush1.msra.mxu0 %v266
    %300 = vmatprep.subr.mxu0 %v269
    %301 = vmatpush1.msra.mxu0 %v268
    %302 = vmatprep.subr.mxu0 %v271
    %303 = vmatpush1.msra.mxu0 %v270
    %304 = vmatprep.subr.mxu0 %v273
    %305 = vmatpush1.msra.mxu0 %v272
    %306 = vmatprep.subr.mxu0 %v275
    %307 = vmatpush1.msra.mxu0 %v274
    %308 = vmatprep.subr.mxu0 %v277
    %309 = vmatpush1.msra.mxu0 %v276
    %310 = vmatprep.subr.mxu0 %v279
    %311 = vmatpush1.msra.mxu0 %v278
    %312 = vmatprep.subr.mxu0 0.0
    %313 = vmatpush1.msra.mxu0 0.0
    %314 = vmatprep.subr.mxu0 0.0
    %315 = vmatpush1.msra.mxu0 0.0
    %316 = vmatprep.subr.mxu0 0.0
    %317 = vmatpush1.msra.mxu0 0.0
    %318 = vmatprep.subr.mxu0 0.0
    %319 = vmatpush1.msra.mxu0 0.0
    %320 = vmatprep.subr.mxu0 0.0
    %321 = vmatpush1.msra.mxu0 0.0
    %322 = vmatprep.subr.mxu0 0.0
    %323 = vmatpush1.msra.mxu0 0.0
    %324 = vmatprep.subr.mxu0 0.0
    %325 = vmatpush1.msra.mxu0 0.0
    %326 = vmatprep.subr.mxu0 0.0
    %327 = vmatpush1.msra.mxu0 0.0
    %328 = vmatprep.subr.mxu0 0.0
    %329 = vmatpush1.msra.mxu0 0.0
    %330 = vmatprep.subr.mxu0 0.0
    %331 = vmatpush1.msra.mxu0 0.0
    %332 = vmatprep.subr.mxu0 0.0
    %333 = vmatpush1.msra.mxu0 0.0
    %334 = vmatprep.subr.mxu0 0.0
    %335 = vmatpush1.msra.mxu0 0.0
    %336 = vmatprep.subr.mxu0 0.0
    %337 = vmatpush1.msra.mxu0 0.0
    %338 = vmatprep.subr.mxu0 0.0
    %339 = vmatpush1.msra.mxu0 0.0
    %340 = vmatprep.subr.mxu0 0.0
    %341 = vmatpush1.msra.mxu0 0.0
    %342 = vmatprep.subr.mxu0 0.0
    %343 = vmatpush1.msra.mxu0 0.0
    %344 = vmatprep.subr.mxu0 0.0
    %345 = vmatpush1.msra.mxu0 0.0
    %346 = vmatprep.subr.mxu0 0.0
    %347 = vmatpush1.msra.mxu0 0.0
    %348 = vmatprep.subr.mxu0 0.0
    %349 = vmatpush1.msra.mxu0 0.0
    %350 = vmatprep.subr.mxu0 0.0
    %351 = vmatpush1.msra.mxu0 0.0
    %352 = vmatprep.subr.mxu0 0.0
    %353 = vmatpush1.msra.mxu0 0.0
    %354 = vmatprep.subr.mxu0 0.0
    %355 = vmatpush1.msra.mxu0 0.0
    %356 = vmatprep.subr.mxu0 0.0
    %357 = vmatpush1.msra.mxu0 0.0
    %358 = vmatprep.subr.mxu0 0.0
    %359 = vmatpush1.msra.mxu0 0.0
    %360 = vmatprep.mubr.f32.mxu0 0.0
    %361 = vmatmul.mubr.f32.gmra.mrb[0].mxu0 %v294
    %v362 = vpop.f32.mrb[0].mxu0
    %v363 = vadd.f32 %v285, %v362
    %v364 = vpop.f32.mrb[0].mxu0
    %v365 = vadd.f32 %v289, %v364
    %366 = vdwg.mxu0
    %v367 = vxor.u32 %v363, 2147483648
    %v368 = vxor.u32 %v365, 2147483648
    %v369 = vmul.f32 %v367, 1.442695
    %v370 = vpow.pop %v369
    %v371 = vmul.f32 %v368, 1.442695
    %v372 = vpow.pop %v371
    %v373 = vadd.f32 %v370, 1.0
    %v374 = vadd.f32 %v372, 1.0
    %v375 = vrcp.pop %v373
    %v376 = vmul.f32 1.0, %v375
    %v377 = vrcp.pop %v374
    %v378 = vmul.f32 1.0, %v377
    %v379 = vmul.f32 %v363, %v376
    %v380 = vmul.f32 %v365, %v378
    %v381 = vld [vmem:[#allocation8] sm:$0xff]
    %v382 = vld [vmem:[#allocation8 + $0x8] sm:$0xff]
    %v383 = vld [vmem:[#allocation8 + $0x10] sm:$0xff]
    %v384 = vld [vmem:[#allocation8 + $0x18] sm:$0xff]
    %v385 = vld [vmem:[#allocation8 + $0x20] sm:$0xff]
    %v386 = vld [vmem:[#allocation8 + $0x28] sm:$0xff]
    %v387 = vld [vmem:[#allocation8 + $0x30] sm:$0xff]
    %v388 = vld [vmem:[#allocation8 + $0x38] sm:$0xff]
    %v389 = vld [vmem:[#allocation10] sm:$0x1]
    %v391 = vlaneseq
    %v392 = vshrl.u32 %v391, 7
    %v393 = vsub.s32 0, %v392
    %v394 = vrot.slane %v389, %v393
    %v397 = vsel %vm292, %v379, 0
    %399 = vmatprep.subr.mxu0 0.0
    %400 = vmatpush1.msra.mxu0 %v381
    %401 = vmatprep.subr.mxu0 0.0
    %402 = vmatpush1.msra.mxu0 %v382
    %403 = vmatprep.subr.mxu0 0.0
    %404 = vmatpush1.msra.mxu0 %v383
    %405 = vmatprep.subr.mxu0 0.0
    %406 = vmatpush1.msra.mxu0 %v384
    %407 = vmatprep.subr.mxu0 0.0
    %408 = vmatpush1.msra.mxu0 %v385
    %409 = vmatprep.subr.mxu0 0.0
    %410 = vmatpush1.msra.mxu0 %v386
    %411 = vmatprep.subr.mxu0 0.0
    %412 = vmatpush1.msra.mxu0 %v387
    %413 = vmatprep.subr.mxu0 0.0
    %414 = vmatpush1.msra.mxu0 %v388
    %415 = vmatprep.subr.mxu0 0.0
    %416 = vmatpush1.msra.mxu0 0.0
    %417 = vmatprep.subr.mxu0 0.0
    %418 = vmatpush1.msra.mxu0 0.0
    %419 = vmatprep.subr.mxu0 0.0
    %420 = vmatpush1.msra.mxu0 0.0
    %421 = vmatprep.subr.mxu0 0.0
    %422 = vmatpush1.msra.mxu0 0.0
    %423 = vmatprep.subr.mxu0 0.0
    %424 = vmatpush1.msra.mxu0 0.0
    %425 = vmatprep.subr.mxu0 0.0
    %426 = vmatpush1.msra.mxu0 0.0
    %427 = vmatprep.subr.mxu0 0.0
    %428 = vmatpush1.msra.mxu0 0.0
    %429 = vmatprep.subr.mxu0 0.0
    %430 = vmatpush1.msra.mxu0 0.0
    %431 = vmatprep.subr.mxu0 0.0
    %432 = vmatpush1.msra.mxu0 0.0
    %433 = vmatprep.subr.mxu0 0.0
    %434 = vmatpush1.msra.mxu0 0.0
    %435 = vmatprep.subr.mxu0 0.0
    %436 = vmatpush1.msra.mxu0 0.0
    %437 = vmatprep.subr.mxu0 0.0
    %438 = vmatpush1.msra.mxu0 0.0
    %439 = vmatprep.subr.mxu0 0.0
    %440 = vmatpush1.msra.mxu0 0.0
    %441 = vmatprep.subr.mxu0 0.0
    %442 = vmatpush1.msra.mxu0 0.0
    %443 = vmatprep.subr.mxu0 0.0
    %444 = vmatpush1.msra.mxu0 0.0
    %445 = vmatprep.subr.mxu0 0.0
    %446 = vmatpush1.msra.mxu0 0.0
    %447 = vmatprep.subr.mxu0 0.0
    %448 = vmatpush1.msra.mxu0 0.0
    %449 = vmatprep.subr.mxu0 0.0
    %450 = vmatpush1.msra.mxu0 0.0
    %451 = vmatprep.subr.mxu0 0.0
    %452 = vmatpush1.msra.mxu0 0.0
    %453 = vmatprep.subr.mxu0 0.0
    %454 = vmatpush1.msra.mxu0 0.0
    %455 = vmatprep.subr.mxu0 0.0
    %456 = vmatpush1.msra.mxu0 0.0
    %457 = vmatprep.subr.mxu0 0.0
    %458 = vmatpush1.msra.mxu0 0.0
    %459 = vmatprep.subr.mxu0 0.0
    %460 = vmatpush1.msra.mxu0 0.0
    %461 = vmatprep.subr.mxu0 0.0
    %462 = vmatpush1.msra.mxu0 0.0
    %463 = vmatprep.mubr.f32.mxu0 0.0
    %464 = vmatmul.mubr.f32.gmra.mrb[0].mxu0 %v397
    %v465 = vpop.f32.mrb[0].mxu0
    %v466 = vadd.f32 %v394, %v465
    %v467 = vpop.f32.mrb[0].mxu0
    %468 = vdwg.mxu0
    %v469 = vadd.f32 %v466, 1.0
    %vm470 = vcmask 254976
    %471 = vst.msk [vmem:[#allocation14] sm:$0x3] %vm470, %v469
    %473 = vrot.lane.b32.xlu0 %v466, 96
    %v474 = vpop.permute.xlu0 %473
    %476 = vst.msk [vmem:[#allocation15] sm:$0x3] %vm470, %v474
    %v477 = vld [vmem:[%s9] sm:$0xff]
    %v478 = vld [vmem:[%s9 + $0x8] sm:$0xff]
    %v479 = vld [vmem:[%s9 + $0x10] sm:$0xff]
    %v480 = vld [vmem:[%s9 + $0x18] sm:$0xff]
    %v481 = vld [vmem:[%s10] sm:$0x1]
    %v483 = vlaneseq
    %v484 = vshrl.u32 %v483, 7
    %v485 = vsub.s32 0, %v484
    %v486 = vrot.slane %v481, %v485
    %488 = vrot.lane.b32.xlu0 %v379, 64
    %v489 = vpop.permute.xlu0 %488
    %vm490 = vcmask 261120
    %v491 = vsel %vm490, %v489, 0
    %493 = vmatprep.subr.mxu0 0.0
    %494 = vmatpush1.msra.mxu0 %v477
    %495 = vmatprep.subr.mxu0 0.0
    %496 = vmatpush1.msra.mxu0 %v478
    %497 = vmatprep.subr.mxu0 0.0
    %498 = vmatpush1.msra.mxu0 %v479
    %499 = vmatprep.subr.mxu0 0.0
    %500 = vmatpush1.msra.mxu0 %v480
    %501 = vmatprep.subr.mxu0 0.0
    %502 = vmatpush1.msra.mxu0 0.0
    %503 = vmatprep.subr.mxu0 0.0
    %504 = vmatpush1.msra.mxu0 0.0
    %505 = vmatprep.subr.mxu0 0.0
    %506 = vmatpush1.msra.mxu0 0.0
    %507 = vmatprep.subr.mxu0 0.0
    %508 = vmatpush1.msra.mxu0 0.0
    %509 = vmatprep.subr.mxu0 0.0
    %510 = vmatpush1.msra.mxu0 0.0
    %511 = vmatprep.subr.mxu0 0.0
    %512 = vmatpush1.msra.mxu0 0.0
    %513 = vmatprep.subr.mxu0 0.0
    %514 = vmatpush1.msra.mxu0 0.0
    %515 = vmatprep.subr.mxu0 0.0
    %516 = vmatpush1.msra.mxu0 0.0
    %517 = vmatprep.subr.mxu0 0.0
    %518 = vmatpush1.msra.mxu0 0.0
    %519 = vmatprep.subr.mxu0 0.0
    %520 = vmatpush1.msra.mxu0 0.0
    %521 = vmatprep.subr.mxu0 0.0
    %522 = vmatpush1.msra.mxu0 0.0
    %523 = vmatprep.subr.mxu0 0.0
    %524 = vmatpush1.msra.mxu0 0.0
    %525 = vmatprep.subr.mxu0 0.0
    %526 = vmatpush1.msra.mxu0 0.0
    %527 = vmatprep.subr.mxu0 0.0
    %528 = vmatpush1.msra.mxu0 0.0
    %529 = vmatprep.subr.mxu0 0.0
    %530 = vmatpush1.msra.mxu0 0.0
    %531 = vmatprep.subr.mxu0 0.0
    %532 = vmatpush1.msra.mxu0 0.0
    %533 = vmatprep.subr.mxu0 0.0
    %534 = vmatpush1.msra.mxu0 0.0
    %535 = vmatprep.subr.mxu0 0.0
    %536 = vmatpush1.msra.mxu0 0.0
    %537 = vmatprep.subr.mxu0 0.0
    %538 = vmatpush1.msra.mxu0 0.0
    %539 = vmatprep.subr.mxu0 0.0
    %540 = vmatpush1.msra.mxu0 0.0
    %541 = vmatprep.subr.mxu0 0.0
    %542 = vmatpush1.msra.mxu0 0.0
    %543 = vmatprep.subr.mxu0 0.0
    %544 = vmatpush1.msra.mxu0 0.0
    %545 = vmatprep.subr.mxu0 0.0
    %546 = vmatpush1.msra.mxu0 0.0
    %547 = vmatprep.subr.mxu0 0.0
    %548 = vmatpush1.msra.mxu0 0.0
    %549 = vmatprep.subr.mxu0 0.0
    %550 = vmatpush1.msra.mxu0 0.0
    %551 = vmatprep.subr.mxu0 0.0
    %552 = vmatpush1.msra.mxu0 0.0
    %553 = vmatprep.subr.mxu0 0.0
    %554 = vmatpush1.msra.mxu0 0.0
    %555 = vmatprep.subr.mxu0 0.0
    %556 = vmatpush1.msra.mxu0 0.0
    %557 = vmatprep.mubr.f32.mxu0 0.0
    %558 = vmatmul.mubr.f32.gmra.mrb[0].mxu0 %v491
    %v559 = vpop.f32.mrb[0].mxu0
    %v560 = vadd.f32 %v486, %v559
    %v561 = vpop.f32.mrb[0].mxu0
    %562 = vdwg.mxu0
    %v563 = vadd.f32 %v560, 1.0
    %vm564 = vcmask 123904
    %565 = vst.msk [vmem:[#allocation17] sm:$0x3] %vm564, %v563
    %567 = vrot.lane.b32.xlu0 %v560, 112
    %v568 = vpop.permute.xlu0 %567
    %570 = vst.msk [vmem:[#allocation18] sm:$0x3] %vm564, %v568
    %v571 = vld [vmem:[#allocation11] sm:$0xff]
    %v572 = vld [vmem:[#allocation11 + $0x8] sm:$0xff]
    %v573 = vld [vmem:[#allocation11 + $0x10] sm:$0xff]
    %v574 = vld [vmem:[#allocation11 + $0x18] sm:$0xff]
    %v575 = vld [vmem:[#allocation11 + $0x20] sm:$0xff]
    %v576 = vld [vmem:[#allocation11 + $0x28] sm:$0xff]
    %v577 = vld [vmem:[#allocation11 + $0x30] sm:$0xff]
    %v578 = vld [vmem:[#allocation11 + $0x38] sm:$0xff]
    %v579 = vld [vmem:[#allocation11 + $0x40] sm:$0xff]
    %v580 = vld [vmem:[#allocation11 + $0x48] sm:$0xff]
    %v581 = vld [vmem:[#allocation11 + $0x50] sm:$0xff]
    %v582 = vld [vmem:[#allocation11 + $0x58] sm:$0xff]
    %v583 = vld [vmem:[%s12] sm:$0x1]
    %v585 = vlaneseq
    %v586 = vshrl.u32 %v585, 7
    %v587 = vsub.s32 0, %v586
    %v588 = vrot.slane %v583, %v587
    %591 = vrot.lane.b32.xlu0 %v379, 32
    %v592 = vpop.permute.xlu0 %591
    %593 = vrot.lane.b32.xlu0 %v380, 32
    %v594 = vpop.permute.xlu0 %593
    %v595 = vsel %vm490, %v592, %v594
    %vm596 = vcmask 785408
    %v597 = vsel %vm596, %v595, 0
    %599 = vmatprep.subr.mxu0 0.0
    %600 = vmatpush1.msra.mxu0 %v571
    %601 = vmatprep.subr.mxu0 0.0
    %602 = vmatpush1.msra.mxu0 %v572
    %603 = vmatprep.subr.mxu0 0.0
    %604 = vmatpush1.msra.mxu0 %v573
    %605 = vmatprep.subr.mxu0 0.0
    %606 = vmatpush1.msra.mxu0 %v574
    %607 = vmatprep.subr.mxu0 0.0
    %608 = vmatpush1.msra.mxu0 %v575
    %609 = vmatprep.subr.mxu0 0.0
    %610 = vmatpush1.msra.mxu0 %v576
    %611 = vmatprep.subr.mxu0 0.0
    %612 = vmatpush1.msra.mxu0 %v577
    %613 = vmatprep.subr.mxu0 0.0
    %614 = vmatpush1.msra.mxu0 %v578
    %615 = vmatprep.subr.mxu0 0.0
    %616 = vmatpush1.msra.mxu0 %v579
    %617 = vmatprep.subr.mxu0 0.0
    %618 = vmatpush1.msra.mxu0 %v580
    %619 = vmatprep.subr.mxu0 0.0
    %620 = vmatpush1.msra.mxu0 %v581
    %621 = vmatprep.subr.mxu0 0.0
    %622 = vmatpush1.msra.mxu0 %v582
    %623 = vmatprep.subr.mxu0 0.0
    %624 = vmatpush1.msra.mxu0 0.0
    %625 = vmatprep.subr.mxu0 0.0
    %626 = vmatpush1.msra.mxu0 0.0
    %627 = vmatprep.subr.mxu0 0.0
    %628 = vmatpush1.msra.mxu0 0.0
    %629 = vmatprep.subr.mxu0 0.0
    %630 = vmatpush1.msra.mxu0 0.0
    %631 = vmatprep.subr.mxu0 0.0
    %632 = vmatpush1.msra.mxu0 0.0
    %633 = vmatprep.subr.mxu0 0.0
    %634 = vmatpush1.msra.mxu0 0.0
    %635 = vmatprep.subr.mxu0 0.0
    %636 = vmatpush1.msra.mxu0 0.0
    %637 = vmatprep.subr.mxu0 0.0
    %638 = vmatpush1.msra.mxu0 0.0
    %639 = vmatprep.subr.mxu0 0.0
    %640 = vmatpush1.msra.mxu0 0.0
    %641 = vmatprep.subr.mxu0 0.0
    %642 = vmatpush1.msra.mxu0 0.0
    %643 = vmatprep.subr.mxu0 0.0
    %644 = vmatpush1.msra.mxu0 0.0
    %645 = vmatprep.subr.mxu0 0.0
    %646 = vmatpush1.msra.mxu0 0.0
    %647 = vmatprep.subr.mxu0 0.0
    %648 = vmatpush1.msra.mxu0 0.0
    %649 = vmatprep.subr.mxu0 0.0
    %650 = vmatpush1.msra.mxu0 0.0
    %651 = vmatprep.subr.mxu0 0.0
    %652 = vmatpush1.msra.mxu0 0.0
    %653 = vmatprep.subr.mxu0 0.0
    %654 = vmatpush1.msra.mxu0 0.0
    %655 = vmatprep.subr.mxu0 0.0
    %656 = vmatpush1.msra.mxu0 0.0
    %657 = vmatprep.subr.mxu0 0.0
    %658 = vmatpush1.msra.mxu0 0.0
    %659 = vmatprep.subr.mxu0 0.0
    %660 = vmatpush1.msra.mxu0 0.0
    %661 = vmatprep.subr.mxu0 0.0
    %662 = vmatpush1.msra.mxu0 0.0
    %663 = vmatprep.mubr.f32.mxu0 0.0
    %664 = vmatmul.mubr.f32.gmra.mrb[0].mxu0 %v597
    %v665 = vpop.f32.mrb[0].mxu0
    %v666 = vadd.f32 %v588, %v665
    %v667 = vpop.f32.mrb[0].mxu0
    %668 = vdwg.mxu0
    %v669 = vadd.f32 %v666, 1.0
    %vm670 = vcmask 386048
    %671 = vst.msk [vmem:[#allocation20] sm:$0x3] %vm670, %v669
    %673 = vrot.lane.b32.xlu0 %v666, 80
    %v674 = vpop.permute.xlu0 %673
    %676 = vst.msk [vmem:[#allocation21] sm:$0x3] %vm670, %v674
    %v677 = vld [vmem:[#allocation13] sm:$0xff]
    %v678 = vld [vmem:[#allocation13 + $0x8] sm:$0xff]
    %v679 = vld [vmem:[#allocation13 + $0x10] sm:$0xff]
    %v680 = vld [vmem:[#allocation13 + $0x18] sm:$0xff]
    %v681 = vld [vmem:[#allocation13 + $0x20] sm:$0xff]
    %v682 = vld [vmem:[#allocation13 + $0x28] sm:$0xff]
    %v683 = vld [vmem:[#allocation13 + $0x30] sm:$0xff]
    %v684 = vld [vmem:[#allocation13 + $0x38] sm:$0xff]
    %v685 = vld [vmem:[%s14] sm:$0x1]
    %v687 = vlaneseq
    %v688 = vshrl.u32 %v687, 7
    %v689 = vsub.s32 0, %v688
    %v690 = vrot.slane %v685, %v689
    %692 = vrot.lane.b32.xlu0 %v380, 64
    %v693 = vpop.permute.xlu0 %692
    %v694 = vsel %vm292, %v693, 0
    %696 = vmatprep.subr.mxu0 0.0
    %697 = vmatpush1.msra.mxu0 %v677
    %698 = vmatprep.subr.mxu0 0.0
    %699 = vmatpush1.msra.mxu0 %v678
    %700 = vmatprep.subr.mxu0 0.0
    %701 = vmatpush1.msra.mxu0 %v679
    %702 = vmatprep.subr.mxu0 0.0
    %703 = vmatpush1.msra.mxu0 %v680
    %704 = vmatprep.subr.mxu0 0.0
    %705 = vmatpush1.msra.mxu0 %v681
    %706 = vmatprep.subr.mxu0 0.0
    %707 = vmatpush1.msra.mxu0 %v682
    %708 = vmatprep.subr.mxu0 0.0
    %709 = vmatpush1.msra.mxu0 %v683
    %710 = vmatprep.subr.mxu0 0.0
    %711 = vmatpush1.msra.mxu0 %v684
    %712 = vmatprep.subr.mxu0 0.0
    %713 = vmatpush1.msra.mxu0 0.0
    %714 = vmatprep.subr.mxu0 0.0
    %715 = vmatpush1.msra.mxu0 0.0
    %716 = vmatprep.subr.mxu0 0.0
    %717 = vmatpush1.msra.mxu0 0.0
    %718 = vmatprep.subr.mxu0 0.0
    %719 = vmatpush1.msra.mxu0 0.0
    %720 = vmatprep.subr.mxu0 0.0
    %721 = vmatpush1.msra.mxu0 0.0
    %722 = vmatprep.subr.mxu0 0.0
    %723 = vmatpush1.msra.mxu0 0.0
    %724 = vmatprep.subr.mxu0 0.0
    %725 = vmatpush1.msra.mxu0 0.0
    %726 = vmatprep.subr.mxu0 0.0
    %727 = vmatpush1.msra.mxu0 0.0
    %728 = vmatprep.subr.mxu0 0.0
    %729 = vmatpush1.msra.mxu0 0.0
    %730 = vmatprep.subr.mxu0 0.0
    %731 = vmatpush1.msra.mxu0 0.0
    %732 = vmatprep.subr.mxu0 0.0
    %733 = vmatpush1.msra.mxu0 0.0
    %734 = vmatprep.subr.mxu0 0.0
    %735 = vmatpush1.msra.mxu0 0.0
    %736 = vmatprep.subr.mxu0 0.0
    %737 = vmatpush1.msra.mxu0 0.0
    %738 = vmatprep.subr.mxu0 0.0
    %739 = vmatpush1.msra.mxu0 0.0
    %740 = vmatprep.subr.mxu0 0.0
    %741 = vmatpush1.msra.mxu0 0.0
    %742 = vmatprep.subr.mxu0 0.0
    %743 = vmatpush1.msra.mxu0 0.0
    %744 = vmatprep.subr.mxu0 0.0
    %745 = vmatpush1.msra.mxu0 0.0
    %746 = vmatprep.subr.mxu0 0.0
    %747 = vmatpush1.msra.mxu0 0.0
    %748 = vmatprep.subr.mxu0 0.0
    %749 = vmatpush1.msra.mxu0 0.0
    %750 = vmatprep.subr.mxu0 0.0
    %751 = vmatpush1.msra.mxu0 0.0
    %752 = vmatprep.subr.mxu0 0.0
    %753 = vmatpush1.msra.mxu0 0.0
    %754 = vmatprep.subr.mxu0 0.0
    %755 = vmatpush1.msra.mxu0 0.0
    %756 = vmatprep.subr.mxu0 0.0
    %757 = vmatpush1.msra.mxu0 0.0
    %758 = vmatprep.subr.mxu0 0.0
    %759 = vmatpush1.msra.mxu0 0.0
    %760 = vmatprep.mubr.f32.mxu0 0.0
    %761 = vmatmul.mubr.f32.gmra.mrb[0].mxu0 %v694
    %v762 = vpop.f32.mrb[0].mxu0
    %v763 = vadd.f32 %v690, %v762
    %v764 = vpop.f32.mrb[0].mxu0
    %765 = vdwg.mxu0
    %v766 = vadd.f32 %v763, 1.0
    %767 = vst.msk [vmem:[#allocation23] sm:$0x3] %vm470, %v766
    %769 = vrot.lane.b32.xlu0 %v763, 96
    %v770 = vpop.permute.xlu0 %769
    %772 = vst.msk [vmem:[#allocation24] sm:$0x3] %vm470, %v770
    // Predicated region
    $region90: #{tpu_custom_call.1} parent=1 // pred_check
      _
    $region91: #{tpu_custom_call.1} parent=1 // pred_check_branch
      %774 = sbr.rel (0) target = $region93
    $region92: #{tpu_custom_call.1} parent=1 // pred_region
      %s776 = ssub.s32 32, 32
      %777 = vsyncadd [#allocation4], %s776
      %s779 = sshll.u32 [#allocation14], 4
      %s780 = int_to_ptr.vmem [resolvable:$true] %s779
      %782 = dma.vmem_to_hbm [thread:$0]  %s780, 32, %s15, [#allocation4]
    $region93: #{tpu_custom_call.1} parent=1 // pred_fallthru
      _
    // Predicated region
    $region94: #{tpu_custom_call.1} parent=1 // pred_check
      _
    $region95: #{tpu_custom_call.1} parent=1 // pred_check_branch
      %784 = sbr.rel (0) target = $region97
    $region96: #{tpu_custom_call.1} parent=1 // pred_region
      %s786 = ssub.s32 32, 32
      %787 = vsyncadd [#allocation16], %s786
      %s789 = sshll.u32 [#allocation15], 4
      %s790 = int_to_ptr.vmem [resolvable:$true] %s789
      %792 = dma.vmem_to_hbm [thread:$0]  %s790, 32, %s16, [#allocation16]
    $region97: #{tpu_custom_call.1} parent=1 // pred_fallthru
      _
    // Predicated region
    $region98: #{tpu_custom_call.1} parent=1 // pred_check
      _
    $region99: #{tpu_custom_call.1} parent=1 // pred_check_branch
      %794 = sbr.rel (0) target = $region101
    $region100: #{tpu_custom_call.1} parent=1 // pred_region
      %s796 = ssub.s32 32, 32
      %797 = vsyncadd [#allocation16], %s796
      %s799 = sshll.u32 [#allocation17], 4
      %s800 = int_to_ptr.vmem [resolvable:$true] %s799
      %802 = dma.vmem_to_hbm [thread:$0]  %s800, 32, %s17, [#allocation16]
    $region101: #{tpu_custom_call.1} parent=1 // pred_fallthru
      _
    // Predicated region
    $region102: #{tpu_custom_call.1} parent=1 // pred_check
      _
    $region103: #{tpu_custom_call.1} parent=1 // pred_check_branch
      %804 = sbr.rel (0) target = $region105
    $region104: #{tpu_custom_call.1} parent=1 // pred_region
      %s806 = ssub.s32 32, 32
      %807 = vsyncadd [#allocation19], %s806
      %s809 = sshll.u32 [#allocation18], 4
      %s810 = int_to_ptr.vmem [resolvable:$true] %s809
      %812 = dma.vmem_to_hbm [thread:$0]  %s810, 32, %s18, [#allocation19]
    $region105: #{tpu_custom_call.1} parent=1 // pred_fallthru
      _
    // Predicated region
    $region106: #{tpu_custom_call.1} parent=1 // pred_check
      _
    $region107: #{tpu_custom_call.1} parent=1 // pred_check_branch
      %814 = sbr.rel (0) target = $region109
    $region108: #{tpu_custom_call.1} parent=1 // pred_region
      %s816 = ssub.s32 32, 32
      %817 = vsyncadd [#allocation19], %s816
      %s819 = sshll.u32 [#allocation20], 4
      %s820 = int_to_ptr.vmem [resolvable:$true] %s819
      %822 = dma.vmem_to_hbm [thread:$0]  %s820, 32, %s19, [#allocation19]
    $region109: #{tpu_custom_call.1} parent=1 // pred_fallthru
      _
    // Predicated region
    $region110: #{tpu_custom_call.1} parent=1 // pred_check
      _
    $region111: #{tpu_custom_call.1} parent=1 // pred_check_branch
      %824 = sbr.rel (0) target = $region113
    $region112: #{tpu_custom_call.1} parent=1 // pred_region
      %s826 = ssub.s32 32, 32
      %827 = vsyncadd [#allocation22], %s826
      %s829 = sshll.u32 [#allocation21], 4
      %s830 = int_to_ptr.vmem [resolvable:$true] %s829
      %832 = dma.vmem_to_hbm [thread:$0]  %s830, 32, %s20, [#allocation22]
    $region113: #{tpu_custom_call.1} parent=1 // pred_fallthru
      _
    // Predicated region
    $region114: #{tpu_custom_call.1} parent=1 // pred_check
      _
    $region115: #{tpu_custom_call.1} parent=1 // pred_check_branch
      %834 = sbr.rel (0) target = $region117
    $region116: #{tpu_custom_call.1} parent=1 // pred_region
      %s836 = ssub.s32 32, 32
      %837 = vsyncadd [#allocation22], %s836
      %s839 = sshll.u32 [#allocation23], 4
      %s840 = int_to_ptr.vmem [resolvable:$true] %s839
      %842 = dma.vmem_to_hbm [thread:$0]  %s840, 32, %s21, [#allocation22]
    $region117: #{tpu_custom_call.1} parent=1 // pred_fallthru
      _
    // Predicated region
    $region118: #{tpu_custom_call.1} parent=1 // pred_check
      _
    $region119: #{tpu_custom_call.1} parent=1 // pred_check_branch
      %844 = sbr.rel (0) target = $region121
    $region120: #{tpu_custom_call.1} parent=1 // pred_region
      %s846 = ssub.s32 32, 32
      %847 = vsyncadd [#allocation25], %s846
      %s849 = sshll.u32 [#allocation24], 4
      %s850 = int_to_ptr.vmem [resolvable:$true] %s849
      %852 = dma.vmem_to_hbm [thread:$0]  %s850, 32, %s22, [#allocation25]
    $region121: #{tpu_custom_call.1} parent=1 // pred_fallthru
      _
    // Predicated region
    $region122: #{tpu_custom_call.1} parent=1 // pred_check
      _
    $region123: #{tpu_custom_call.1} parent=1 // pred_check_branch
      %854 = sbr.rel (0) target = $region125
    $region124: #{tpu_custom_call.1} parent=1 // pred_region
      %855 = dma.done [#allocation4], 32
    $region125: #{tpu_custom_call.1} parent=1 // pred_fallthru
      _
    // Predicated region
    $region126: #{tpu_custom_call.1} parent=1 // pred_check
      _
    $region127: #{tpu_custom_call.1} parent=1 // pred_check_branch
      %857 = sbr.rel (0) target = $region129
    $region128: #{tpu_custom_call.1} parent=1 // pred_region
      %858 = dma.done [#allocation16], 32
    $region129: #{tpu_custom_call.1} parent=1 // pred_fallthru
      _
    // Predicated region
    $region130: #{tpu_custom_call.1} parent=1 // pred_check
      _
    $region131: #{tpu_custom_call.1} parent=1 // pred_check_branch
      %860 = sbr.rel (0) target = $region133
    $region132: #{tpu_custom_call.1} parent=1 // pred_region
      %861 = dma.done [#allocation16], 32
    $region133: #{tpu_custom_call.1} parent=1 // pred_fallthru
      _
    // Predicated region
    $region134: #{tpu_custom_call.1} parent=1 // pred_check
      _
    $region135: #{tpu_custom_call.1} parent=1 // pred_check_branch
      %863 = sbr.rel (0) target = $region137
    $region136: #{tpu_custom_call.1} parent=1 // pred_region
      %864 = dma.done [#allocation19], 32
    $region137: #{tpu_custom_call.1} parent=1 // pred_fallthru
      _
    // Predicated region
    $region138: #{tpu_custom_call.1} parent=1 // pred_check
      _
    $region139: #{tpu_custom_call.1} parent=1 // pred_check_branch
      %866 = sbr.rel (0) target = $region141
    $region140: #{tpu_custom_call.1} parent=1 // pred_region
      %867 = dma.done [#allocation19], 32
    $region141: #{tpu_custom_call.1} parent=1 // pred_fallthru
      _
    // Predicated region
    $region142: #{tpu_custom_call.1} parent=1 // pred_check
      _
    $region143: #{tpu_custom_call.1} parent=1 // pred_check_branch
      %869 = sbr.rel (0) target = $region145
    $region144: #{tpu_custom_call.1} parent=1 // pred_region
      %870 = dma.done [#allocation22], 32
    $region145: #{tpu_custom_call.1} parent=1 // pred_fallthru
      _
    // Predicated region
    $region146: #{tpu_custom_call.1} parent=1 // pred_check
      _
    $region147: #{tpu_custom_call.1} parent=1 // pred_check_branch
      %872 = sbr.rel (0) target = $region149
    $region148: #{tpu_custom_call.1} parent=1 // pred_region
      %873 = dma.done [#allocation22], 32
    $region149: #{tpu_custom_call.1} parent=1 // pred_fallthru
      _
    // Predicated region
    $region150: #{tpu_custom_call.1} parent=1 // pred_check
      _
    $region151: #{tpu_custom_call.1} parent=1 // pred_check_branch
      %875 = sbr.rel (0) target = $region153
    $region152: #{tpu_custom_call.1} parent=1 // pred_region
      %876 = dma.done [#allocation25], 32
    $region153: #{tpu_custom_call.1} parent=1 // pred_fallthru
      _
    %877 = vsyncpa [#allocation3], 1
    %878 = vsyncpa [#allocation6], 1
    %879 = vsyncpa [#allocation9], 1
    %880 = vsyncpa [#allocation12], 1
    %881 = vsyncpa [#allocation4], 1
    %882 = vsyncpa [#allocation16], 1
    %883 = vsyncpa [#allocation19], 1
    %884 = vsyncpa [#allocation22], 1
    %885 = vsyncpa [#allocation25], 1

</llo_original>
